<compile_context>
chip_gen: v7x
topology: tpu7x:2x2x1
jax: 0.10.0
libtpu: 0.0.40
codegen_flags: <defaults>
</compile_context>

<pallas_src>
import math

import jax
import jax.numpy as jnp
from jax.experimental import pallas as pl
from jax.experimental.pallas import tpu as pltpu

HIDDEN = 300           # logical hidden width of Actor (nn.Linear(..., 300))
H_PAD = 384            # 300 padded up to 3 * 128 lanes
MAX_ACTION = 1.0       # Actor(..., max_action=1) inside ControllerActor
TB_MAX = 1024          # max batch-tile rows (~7 MiB VMEM at this size)


def _round_up(x, m):
    return ((x + m - 1) // m) * m


def _pick_tiling(batch, *, tb_max=TB_MAX, min_blocks=2, split_threshold=256):
    """Choose (tile_rows, num_blocks) for the batch axis.

    * tiles as large as possible (up to tb_max) to amortize the ~0.35us/step
      pipeline overhead,
    * at least `min_blocks` grid steps once the batch is big enough so the
      "parallel" axis can be sharded across v7x's two TensorCores,
    * tb = round_up(cdiv(B, nb), 8) instead of a fixed power of two, so an
      awkward batch (e.g. 300) pads to 304 rows instead of 512.
    """
    nb = pl.cdiv(batch, tb_max)
    if batch >= split_threshold:
        nb = max(nb, min_blocks)
    tb = _round_up(pl.cdiv(batch, max(nb, 1)), 8)
    return tb, pl.cdiv(batch, tb)


def _controller_actor_kernel(xg_ref, w1_ref, w2_ref, w3_ref, b_ref, scale_ref,
                             o_ref):
    # Scalar epilogue factor (max_action * scale), read once from SMEM.
    s = MAX_ACTION * scale_ref[0]

    # Packed f32 biases: [b1 (384) | b2 (384) | b3 (A_PAD)] -- 128-aligned cuts.
    b1 = b_ref[:, :H_PAD]
    b2 = b_ref[:, H_PAD:2 * H_PAD]
    b3 = b_ref[:, 2 * H_PAD:]

    # layer 1: relu([x, g] @ W1 + b1)   (input already bf16, single matmul)
    h1 = jnp.dot(xg_ref[...], w1_ref[...], preferred_element_type=jnp.float32)
    h1 = jnp.maximum(h1 + b1, 0.0)

    # layer 2: relu(h1 @ W2 + b2)
    h2 = jnp.dot(h1.astype(jnp.bfloat16), w2_ref[...],
                 preferred_element_type=jnp.float32)
    h2 = jnp.maximum(h2 + b2, 0.0)

    # layer 3: (max_action * scale) * tanh(h2 @ W3 + b3)
    h3 = jnp.dot(h2.astype(jnp.bfloat16), w3_ref[...],
                 preferred_element_type=jnp.float32)
    o_ref[...] = (jnp.tanh(h3 + b3) * s).astype(o_ref.dtype)


def controller_actor_forward_padded(x, g, params):
    """x: (B, state_dim), g: (B, goal_dim) -> (B, A_PAD) f32.

    Returns the lane-padded output (action_dim zero-padded up to a multiple of
    128; the padded lanes are exactly 0).  Slice [:, :action_dim] lazily at the
    consumer so the kernel's stores stay lane-dense and no extra HBM round trip
    is spent re-reading the output just to shrink it.
    """
    w1, w2, w3, b_packed, scale = params
    B = x.shape[0]
    IN = w1.shape[0]          # state_dim + goal_dim
    H = w2.shape[0]           # padded hidden (384)
    A = w3.shape[1]           # padded action (multiple of 128)

    # Single small wrapper op: fused concat + bf16 cast (no batch zero-pad,
    # half the streamed bytes, and a single layer-1 matmul in the kernel).
    xg = jnp.concatenate([x, g], axis=1).astype(jnp.bfloat16)
    assert xg.shape[1] == IN

    TB, nb = _pick_tiling(B)

    def resident(shape):
        # Weights / biases: same block every grid step -> stay VMEM-resident.
        return pl.BlockSpec(shape, lambda i: (0, 0))

    flops = 2 * nb * TB * (IN * H + H * H + H * A)
    bytes_accessed = (
        xg.size * 2 + B * A * 4                        # bf16 input, f32 output
        + (w1.size + w2.size + w3.size) * 2            # bf16 weights
        + b_packed.size * 4 + scale.size * 4           # f32 biases + scale
    )

    return pl.pallas_call(
        _controller_actor_kernel,
        out_shape=jax.ShapeDtypeStruct((B, A), jnp.float32),
        grid=(nb,),
        in_specs=[
            pl.BlockSpec((TB, IN), lambda i: (i, 0)),   # [x, g] tile (streams)
            resident((IN, H)),                          # W1
            resident((H, H)),                           # W2
            resident((H, A)),                           # W3
            resident((1, 2 * H + A)),                   # packed biases
            pl.BlockSpec(memory_space=pltpu.MemorySpace.SMEM),   # scale scalar
        ],
        out_specs=pl.BlockSpec((TB, A), lambda i: (i, 0)),
        compiler_params=pltpu.CompilerParams(
            dimension_semantics=("parallel",),
            vmem_limit_bytes=32 * 1024 * 1024),
        cost_estimate=pl.CostEstimate(
            flops=flops,
            transcendentals=nb * TB * A,
            bytes_accessed=bytes_accessed),
    )(xg, w1, w2, w3, b_packed, scale)


def init_params(key, state_dim, goal_dim, action_dim, scale_value=1.0):
    """Deterministic synthetic parameters matching the PyTorch module.

    PyTorch Linear stores weight as (out, in); here weights are kept (in, out)
    so the kernel computes x @ W.  Hidden/action dims are zero-padded to
    lane-aligned sizes (results unchanged: padded rows/cols/bias lanes are 0),
    weights are stored bf16 (f32 accumulation on the MXU), and the three
    biases are packed into one lane-aligned f32 array.
    """
    in_dim = state_dim + goal_dim
    k = jax.random.split(key, 6)

    def lin(kw, kb, fan_in, fan_out):
        bound = 1.0 / math.sqrt(fan_in)
        w = jax.random.uniform(kw, (fan_in, fan_out), jnp.float32, -bound, bound)
        b = jax.random.uniform(kb, (fan_out,), jnp.float32, -bound, bound)
        return w, b

    w1, b1 = lin(k[0], k[1], in_dim, HIDDEN)
    w2, b2 = lin(k[2], k[3], HIDDEN, HIDDEN)
    w3, b3 = lin(k[4], k[5], HIDDEN, action_dim)

    a_pad = _round_up(max(action_dim, 1), 128)

    w1p = jnp.zeros((in_dim, H_PAD), jnp.float32).at[:, :HIDDEN].set(w1)
    w2p = jnp.zeros((H_PAD, H_PAD), jnp.float32).at[:HIDDEN, :HIDDEN].set(w2)
    w3p = jnp.zeros((H_PAD, a_pad), jnp.float32).at[:HIDDEN, :action_dim].set(w3)

    b_packed = jnp.zeros((1, 2 * H_PAD + a_pad), jnp.float32)
    b_packed = b_packed.at[0, :HIDDEN].set(b1)
    b_packed = b_packed.at[0, H_PAD:H_PAD + HIDDEN].set(b2)
    b_packed = b_packed.at[0, 2 * H_PAD:2 * H_PAD + action_dim].set(b3)

    scale = jnp.array([scale_value], dtype=jnp.float32)   # ControllerActor.scale

    return (w1p.astype(jnp.bfloat16), w2p.astype(jnp.bfloat16),
            w3p.astype(jnp.bfloat16), b_packed, scale)


def reference_forward(x, g, params, *, action_dim, bf16_activations=True):
    """Pure-JAX reference.

    bf16_activations=True mirrors the kernel's numerics (bf16 matmul inputs,
    f32 accumulation) for a tight check; False keeps activations in f32 for a
    looser full-precision (PyTorch-style) sanity check.
    """
    w1, w2, w3, b_packed, scale = params
    f32 = jnp.float32
    b1 = b_packed[:, :H_PAD]
    b2 = b_packed[:, H_PAD:2 * H_PAD]
    b3 = b_packed[:, 2 * H_PAD:]

    def q(v):
        return v.astype(jnp.bfloat16).astype(f32) if bf16_activations else v.astype(f32)

    xg = jnp.concatenate([x, g], axis=1)
    h1 = jnp.maximum(q(xg) @ w1.astype(f32) + b1, 0.0)
    h2 = jnp.maximum(q(h1) @ w2.astype(f32) + b2, 0.0)
    h3 = q(h2) @ w3.astype(f32) + b3
    return ((MAX_ACTION * scale[0]) * jnp.tanh(h3))[:, :action_dim]


if __name__ == "__main__":
    state_dim, goal_dim, action_dim = 16, 8, 4
    batch = 2

    key = jax.random.PRNGKey(0)
    kx, kg, kp = jax.random.split(key, 3)
    x = jax.random.normal(kx, (batch, state_dim), dtype=jnp.float32)
    g = jax.random.normal(kg, (batch, goal_dim), dtype=jnp.float32)
    params = init_params(kp, state_dim, goal_dim, action_dim, scale_value=1.0)

    out_padded = controller_actor_forward_padded(x, g, params)
    out_padded = jax.block_until_ready(out_padded)
    assert out_padded.shape == (batch, 128)

    # Consumer-side lazy slice down to the real action dim.
    out = out_padded[:, :action_dim]
    assert out.shape == (batch, action_dim)

    # Tight check: same bf16-weight / bf16-activation numerics as the kernel.
    ref_tight = reference_forward(x, g, params, action_dim=action_dim,
                                  bf16_activations=True)
    assert jnp.allclose(out, ref_tight, atol=1e-4, rtol=1e-4), "mismatch vs bf16 reference"

    # Loose check: full-f32 activation math (PyTorch-style forward semantics).
    ref_loose = reference_forward(x, g, params, action_dim=action_dim,
                                  bf16_activations=False)
    assert jnp.allclose(out, ref_loose, atol=3e-2, rtol=3e-2), "mismatch vs f32 reference"

    print("KERNEL_OK")
</pallas_src>

<mosaic_0001>
module attributes {stable_mosaic.version = 11 : i64} {
  func.func @_controller_actor_kernel(%arg0: i32, %arg1: memref<8x24xbf16, #tpu.memory_space<vmem>>, %arg2: memref<24x384xbf16, #tpu.memory_space<vmem>>, %arg3: memref<384x384xbf16, #tpu.memory_space<vmem>>, %arg4: memref<384x128xbf16, #tpu.memory_space<vmem>>, %arg5: memref<1x896xf32, #tpu.memory_space<vmem>>, %arg6: memref<1xf32, #tpu.memory_space<smem>>, %arg7: memref<8x128xf32, #tpu.memory_space<vmem>>) attributes {dimension_semantics = [#tpu.dimension_semantics<parallel>], iteration_bounds = array<i64: 1>, scalar_prefetch = 0 : i64, scratch_operands = 0 : i64, tpu.core_type = #tpu.core_type<tc>, window_params = [{transform_indices = @transform_0, window_bounds = array<i64: 8, 24>}, {pipeline_mode = #tpu.pipeline_mode<synchronous>, transform_indices = @transform_1, window_bounds = array<i64: 24, 384>}, {pipeline_mode = #tpu.pipeline_mode<synchronous>, transform_indices = @transform_2, window_bounds = array<i64: 384, 384>}, {pipeline_mode = #tpu.pipeline_mode<synchronous>, transform_indices = @transform_3, window_bounds = array<i64: 384, 128>}, {pipeline_mode = #tpu.pipeline_mode<synchronous>, transform_indices = @transform_4, window_bounds = array<i64: 1, 896>}, {transform_indices = @transform_5, window_bounds = array<i64: 1>}, {transform_indices = @transform_6, window_bounds = array<i64: 8, 128>}]} {
    %c0 = arith.constant 0 : index
    %0 = memref.load %arg6[%c0] : memref<1xf32, #tpu.memory_space<smem>>
    %cst = arith.constant 1.000000e+00 : f32
    %1 = arith.mulf %cst, %0 : f32
    %c0_0 = arith.constant 0 : index
    %c0_1 = arith.constant 0 : index
    %2 = vector.load %arg5[%c0_0, %c0_1] : memref<1x896xf32, #tpu.memory_space<vmem>>, vector<1x384xf32>
    %c0_2 = arith.constant 0 : index
    %c384 = arith.constant 384 : index
    %3 = vector.load %arg5[%c0_2, %c384] : memref<1x896xf32, #tpu.memory_space<vmem>>, vector<1x384xf32>
    %c0_3 = arith.constant 0 : index
    %c768 = arith.constant 768 : index
    %4 = vector.load %arg5[%c0_3, %c768] : memref<1x896xf32, #tpu.memory_space<vmem>>, vector<1x128xf32>
    %c0_4 = arith.constant 0 : index
    %c0_5 = arith.constant 0 : index
    %5 = vector.load %arg1[%c0_4, %c0_5] : memref<8x24xbf16, #tpu.memory_space<vmem>>, vector<8x24xbf16>
    %c0_6 = arith.constant 0 : index
    %c0_7 = arith.constant 0 : index
    %6 = vector.load %arg2[%c0_6, %c0_7] : memref<24x384xbf16, #tpu.memory_space<vmem>>, vector<24x384xbf16>
    %cst_8 = arith.constant dense<0.000000e+00> : vector<8x384xf32>
    %7 = tpu.matmul %5, %6, %cst_8 {dimension_numbers = #tpu.dot_dimension_numbers<[1], [0], [0], [1], [0, 0, 1, 1], [], []>} : vector<8x24xbf16>, vector<24x384xbf16>, vector<8x384xf32> -> vector<8x384xf32>
    %8 = vector.broadcast %2 : vector<1x384xf32> to vector<8x384xf32>
    %9 = arith.addf %7, %8 : vector<8x384xf32>
    %cst_9 = arith.constant 0.000000e+00 : f32
    %10 = vector.broadcast %cst_9 : f32 to vector<8x384xf32>
    %11 = arith.maximumf %9, %10 : vector<8x384xf32>
    %12 = arith.truncf %11 : vector<8x384xf32> to vector<8x384xbf16>
    %c0_10 = arith.constant 0 : index
    %c0_11 = arith.constant 0 : index
    %13 = vector.load %arg3[%c0_10, %c0_11] : memref<384x384xbf16, #tpu.memory_space<vmem>>, vector<384x384xbf16>
    %cst_12 = arith.constant dense<0.000000e+00> : vector<8x384xf32>
    %14 = tpu.matmul %12, %13, %cst_12 {dimension_numbers = #tpu.dot_dimension_numbers<[1], [0], [0], [1], [0, 0, 1, 1], [], []>} : vector<8x384xbf16>, vector<384x384xbf16>, vector<8x384xf32> -> vector<8x384xf32>
    %15 = vector.broadcast %3 : vector<1x384xf32> to vector<8x384xf32>
    %16 = arith.addf %14, %15 : vector<8x384xf32>
    %cst_13 = arith.constant 0.000000e+00 : f32
    %17 = vector.broadcast %cst_13 : f32 to vector<8x384xf32>
    %18 = arith.maximumf %16, %17 : vector<8x384xf32>
    %19 = arith.truncf %18 : vector<8x384xf32> to vector<8x384xbf16>
    %c0_14 = arith.constant 0 : index
    %c0_15 = arith.constant 0 : index
    %20 = vector.load %arg4[%c0_14, %c0_15] : memref<384x128xbf16, #tpu.memory_space<vmem>>, vector<384x128xbf16>
    %cst_16 = arith.constant dense<0.000000e+00> : vector<8x128xf32>
    %21 = tpu.matmul %19, %20, %cst_16 {dimension_numbers = #tpu.dot_dimension_numbers<[1], [0], [0], [1], [0, 0, 1, 1], [], []>} : vector<8x384xbf16>, vector<384x128xbf16>, vector<8x128xf32> -> vector<8x128xf32>
    %22 = vector.broadcast %4 : vector<1x128xf32> to vector<8x128xf32>
    %23 = arith.addf %21, %22 : vector<8x128xf32>
    %24 = math.tanh %23 : vector<8x128xf32>
    %25 = vector.broadcast %1 : f32 to vector<8x128xf32>
    %26 = arith.mulf %24, %25 : vector<8x128xf32>
    %c0_17 = arith.constant 0 : index
    %c0_18 = arith.constant 0 : index
    %27 = vector.load %arg7[%c0_17, %c0_18] : memref<8x128xf32, #tpu.memory_space<vmem>>, vector<8x128xf32>
    tpu.vector_store %arg7[%c0_17, %c0_18], %26 {strides = array<i32>} : memref<8x128xf32, #tpu.memory_space<vmem>>, vector<8x128xf32>,
    return
  }
  func.func @transform_0(%arg0: i32) -> (i32, i32) {
    %c0_i32 = arith.constant 0 : i32
    %c0_i32_0 = arith.constant 0 : i32
    return %arg0, %c0_i32 : i32, i32
  }
  func.func @transform_1(%arg0: i32) -> (i32, i32) {
    %c0_i32 = arith.constant 0 : i32
    %c0_i32_0 = arith.constant 0 : i32
    %c0_i32_1 = arith.constant 0 : i32
    return %c0_i32, %c0_i32_0 : i32, i32
  }
  func.func @transform_2(%arg0: i32) -> (i32, i32) {
    %c0_i32 = arith.constant 0 : i32
    %c0_i32_0 = arith.constant 0 : i32
    %c0_i32_1 = arith.constant 0 : i32
    return %c0_i32, %c0_i32_0 : i32, i32
  }
  func.func @transform_3(%arg0: i32) -> (i32, i32) {
    %c0_i32 = arith.constant 0 : i32
    %c0_i32_0 = arith.constant 0 : i32
    %c0_i32_1 = arith.constant 0 : i32
    return %c0_i32, %c0_i32_0 : i32, i32
  }
  func.func @transform_4(%arg0: i32) -> (i32, i32) {
    %c0_i32 = arith.constant 0 : i32
    %c0_i32_0 = arith.constant 0 : i32
    %c0_i32_1 = arith.constant 0 : i32
    return %c0_i32, %c0_i32_0 : i32, i32
  }
  func.func @transform_5(%arg0: i32) -> i32 {
    %c0_i32 = arith.constant 0 : i32
    %c0_i32_0 = arith.constant 0 : i32
    return %c0_i32 : i32
  }
  func.func @transform_6(%arg0: i32) -> (i32, i32) {
    %c0_i32 = arith.constant 0 : i32
    %c0_i32_0 = arith.constant 0 : i32
    return %arg0, %c0_i32 : i32, i32
  }
}

</mosaic_0001>

<llo_original>
// kernel: tpu_custom_call.1
$region0: #{tpu_custom_call.1}
  #allocation0 [shape = 'u32[]', space=smem, size = 0x4, offset = 0x4, fixed_abs, tag = 'smem constant byte address 0x4 - core index']
  #allocation1 [shape = 'u32[144,128]{1,0:T(1,128)}', space=vmem, size = 0x12000, scoped, tag = 'internal scratch']
  #allocation2 [shape = 'f32[1]{0:T(128)S(6)}', space=smem, size = 0x200, scoped, tag = 'scoped memory for tpu_custom_call.1']
  %s0 = inlined_call_operand.vmem [shape: bf16[2,24], index: 0, kind: input, shape index: {}]
  %s1 = inlined_call_operand.hbm [shape: bf16[24,384], index: 1, kind: input, shape index: {}]
  %s2 = inlined_call_operand.hbm [shape: bf16[384,384], index: 2, kind: input, shape index: {}]
  %s3 = inlined_call_operand.hbm [shape: bf16[384,128], index: 3, kind: input, shape index: {}]
  %s4 = inlined_call_operand.vmem [shape: f32[1,896], index: 4, kind: input, shape index: {}]
  %s5 = inlined_call_operand.<no memory space> [shape: f32[1], index: 5, kind: input, shape index: {}]
  %s6 = inlined_call_operand.hbm [shape: f32[2,128], index: 6, kind: output, shape index: {}]
  %s7 = sld [smem:[#allocation0]]
  $region46: #{tpu_custom_call.1} parent=0
    _
  %s9 = ssub.s32 1, %s7
  %s10 = scalar_select 0, %s9, %s7
  %11 = sst [smem:[#allocation2]] %s5
  $region1: #{tpu_custom_call.1} parent=0
    #allocation3 [shape = 'u8[18432]{0}', space=vmem, size = 0x4800, scoped, tag = 'input window, operand 1, single buffered']
    #allocation4 [shape = 's32[1]{0}', space=sflag, size = 0x4, scoped, tag = 'scoped memory for tpu_custom_call.1']
    #allocation5 [shape = 's32[1]{0}', space=sflag, size = 0x4, scoped, tag = 'scoped memory for tpu_custom_call.1']
    #allocation6 [shape = 'u8[294912]{0}', space=vmem, size = 0x48000, scoped, tag = 'input window, operand 2, single buffered']
    #allocation7 [shape = 's32[1]{0}', space=sflag, size = 0x4, scoped, tag = 'scoped memory for tpu_custom_call.1']
    #allocation8 [shape = 'u8[98304]{0}', space=vmem, size = 0x18000, scoped, tag = 'input window, operand 3, single buffered']
    #allocation9 [shape = 'u8[4096]{0}', space=vmem, size = 0x1000, scoped, tag = 'output window, operand 0, single buffered']
    %12 = vsyncpa [#allocation4], 0
    %13 = vsyncpa [#allocation7], 0
    %14 = vsyncpa [#allocation5], 0
    // Predicated region
    $region2: #{tpu_custom_call.1} parent=1 // pred_check
      _
    $region3: #{tpu_custom_call.1} parent=1 // pred_check_branch
      %16 = sbr.rel (0) target = $region5
    $region4: #{tpu_custom_call.1} parent=1 // pred_region
      _
    $region5: #{tpu_custom_call.1} parent=1 // pred_fallthru
      _
    // Predicated region
    $region6: #{tpu_custom_call.1} parent=1 // pred_check
      _
    $region7: #{tpu_custom_call.1} parent=1 // pred_check_branch
      %18 = sbr.rel (0) target = $region9
    $region8: #{tpu_custom_call.1} parent=1 // pred_region
      %s20 = ssub.s32 576, 576
      %21 = vsyncadd [#allocation4], %s20
      %s22 = sshll.u32 [#allocation3], 4
      %s23 = int_to_ptr.vmem [resolvable:$true] %s22
      %28 = dma.hbm_to_vmem [thread:$0]  %s1, 576, %s23, [#allocation4], 192, 192, 12
    $region9: #{tpu_custom_call.1} parent=1 // pred_fallthru
      _
    // Predicated region
    $region10: #{tpu_custom_call.1} parent=1 // pred_check
      _
    $region11: #{tpu_custom_call.1} parent=1 // pred_check_branch
      %30 = sbr.rel (0) target = $region13
    $region12: #{tpu_custom_call.1} parent=1 // pred_region
      %s32 = ssub.s32 9216, 9216
      %33 = vsyncadd [#allocation7], %s32
      %s34 = sshll.u32 [#allocation6], 4
      %s35 = int_to_ptr.vmem [resolvable:$true] %s34
      %40 = dma.hbm_to_vmem [thread:$0]  %s2, 9216, %s35, [#allocation7], 192, 192, 12
    $region13: #{tpu_custom_call.1} parent=1 // pred_fallthru
      _
    // Predicated region
    $region14: #{tpu_custom_call.1} parent=1 // pred_check
      _
    $region15: #{tpu_custom_call.1} parent=1 // pred_check_branch
      %42 = sbr.rel (0) target = $region17
    $region16: #{tpu_custom_call.1} parent=1 // pred_region
      %s44 = ssub.s32 3072, 3072
      %45 = vsyncadd [#allocation7], %s44
      %s46 = sshll.u32 [#allocation8], 4
      %s47 = int_to_ptr.vmem [resolvable:$true] %s46
      %52 = dma.hbm_to_vmem [thread:$0]  %s3, 3072, %s47, [#allocation7], 64, 64, 4
    $region17: #{tpu_custom_call.1} parent=1 // pred_fallthru
      _
    // Predicated region
    $region18: #{tpu_custom_call.1} parent=1 // pred_check
      _
    $region19: #{tpu_custom_call.1} parent=1 // pred_check_branch
      %54 = sbr.rel (0) target = $region21
    $region20: #{tpu_custom_call.1} parent=1 // pred_region
      _
    $region21: #{tpu_custom_call.1} parent=1 // pred_fallthru
      _
    // Predicated region
    $region22: #{tpu_custom_call.1} parent=1 // pred_check
      _
    $region23: #{tpu_custom_call.1} parent=1 // pred_check_branch
      %56 = sbr.rel (0) target = $region25
    $region24: #{tpu_custom_call.1} parent=1 // pred_region
      _
    $region25: #{tpu_custom_call.1} parent=1 // pred_fallthru
      _
    // Predicated region
    $region26: #{tpu_custom_call.1} parent=1 // pred_check
      _
    $region27: #{tpu_custom_call.1} parent=1 // pred_check_branch
      %58 = sbr.rel (0) target = $region29
    $region28: #{tpu_custom_call.1} parent=1 // pred_region
      %59 = dma.done [#allocation4], 576
    $region29: #{tpu_custom_call.1} parent=1 // pred_fallthru
      _
    // Predicated region
    $region30: #{tpu_custom_call.1} parent=1 // pred_check
      _
    $region31: #{tpu_custom_call.1} parent=1 // pred_check_branch
      %61 = sbr.rel (0) target = $region33
    $region32: #{tpu_custom_call.1} parent=1 // pred_region
      %62 = dma.done [#allocation7], 9216
    $region33: #{tpu_custom_call.1} parent=1 // pred_fallthru
      _
    // Predicated region
    $region34: #{tpu_custom_call.1} parent=1 // pred_check
      _
    $region35: #{tpu_custom_call.1} parent=1 // pred_check_branch
      %64 = sbr.rel (0) target = $region37
    $region36: #{tpu_custom_call.1} parent=1 // pred_region
      %65 = dma.done [#allocation7], 3072
    $region37: #{tpu_custom_call.1} parent=1 // pred_fallthru
      _
    %s67 = sld [smem:[#allocation2]]
    %v68 = vld [vmem:[%s4] sm:$0x7]
    %v69 = vld [vmem:[%s4 + $0x3] sm:$0x7]
    %v70 = vld [vmem:[%s4 + $0x6] sm:$0x1]
    %v71 = vld [vmem:[%s0] sm:$0x1]
    %v72 = vld [vmem:[%s0 + $0x1] sm:$0x1]
    %v73 = vld [vmem:[%s0 + $0x2] sm:$0x1]
    %v74 = vld [vmem:[%s0 + $0x3] sm:$0x1]
    %v75 = vld [vmem:[#allocation3] sm:$0xff]
    %v76 = vld [vmem:[#allocation3 + $0x8] sm:$0xf]
    %v77 = vld [vmem:[#allocation3 + $0xc] sm:$0xff]
    %v78 = vld [vmem:[#allocation3 + $0x14] sm:$0xf]
    %v79 = vld [vmem:[#allocation3 + $0x18] sm:$0xff]
    %v80 = vld [vmem:[#allocation3 + $0x20] sm:$0xf]
    %v82 = vlaneseq
    %v83 = vshrl.u32 %v82, 7
    %v84 = vsub.s32 0, %v83
    %v85 = vrot.slane %v68, %v84
    %v86 = vlaneseq
    %v87 = vshrl.u32 %v86, 7
    %v88 = vsub.s32 1, %v87
    %v89 = vrot.slane %v68, %v88
    %v90 = vlaneseq
    %v91 = vshrl.u32 %v90, 7
    %v92 = vsub.s32 2, %v91
    %v93 = vrot.slane %v68, %v92
    %v101 = vcombine.low %v71, %v72
    %v102 = vcombine.low %v73, %v74
    %v104 = vunpack.c.l.s4 1966171168
    %v105 = vunpack.c.0.s8 %v104
    %v106 = vlaneseq
    %v107 = vshrl.u32 %v106, 7
    %v108 = vsub.s32 %v105, %v107
    %v109 = vrot.slane %v101, %v108
    %v111 = vunpack.c.l.s4 1966171168
    %v112 = vunpack.c.0.s8 %v111
    %v113 = vlaneseq
    %v114 = vshrl.u32 %v113, 7
    %v115 = vsub.s32 %v112, %v114
    %v116 = vrot.slane %v102, %v115
    %v117 = vcombine.low %v109, %v116
    %v119 = vunpack.c.l.s4 1966171168
    %v120 = vunpack.c.0.s8 %v119
    %v121 = vlaneseq
    %v122 = vshrl.u32 %v121, 7
    %v123 = vsub.s32 %v120, %v122
    %v124 = vrot.slane %v117, %v123
    %v131 = vunpack.c.l.b16 %v75
    %v132 = vunpack.c.h.b16 %v75
    %v133 = vunpack.c.l.b16 %v76
    %v134 = vunpack.c.l.b16 %v77
    %v135 = vunpack.c.h.b16 %v77
    %v136 = vunpack.c.l.b16 %v78
    %v137 = vunpack.c.l.b16 %v79
    %v138 = vunpack.c.h.b16 %v79
    %v139 = vunpack.c.l.b16 %v80
    %v140 = vpack.c.b16 %v134, %v131
    %v141 = vpack.c.b16 %v135, %v132
    %v142 = vpack.c.b16 %v136, %v133
    %v143 = vpack.c.b16 %v137, %v137
    %v144 = vpack.c.b16 %v138, %v138
    %v145 = vpack.c.b16 %v139, %v139
    %vm149 = vcmask 195584
    %v151 = vsel %vm149, %v124, 0
    %vm153 = vcmask 1043456
    %v155 = vsel %vm153, %v143, 0
    %v158 = vsel %vm153, %v144, 0
    %v161 = vsel %vm153, %v145, 0
    %163 = vmatprep.subr.bf16.mxu0 %v141
    %164 = vmatpush1.bf16.msra.mxu0 %v140
    %165 = vmatprep.subr.bf16.mxu0 %v158
    %166 = vmatpush1.bf16.msra.mxu0 %v155
    %167 = vmatprep.subr.bf16.mxu0 0
    %168 = vmatpush1.bf16.msra.mxu0 0
    %169 = vmatprep.subr.bf16.mxu0 0
    %170 = vmatpush1.bf16.msra.mxu0 0
    %171 = vmatprep.subr.bf16.mxu0 0
    %172 = vmatpush1.bf16.msra.mxu0 0
    %173 = vmatprep.subr.bf16.mxu0 0
    %174 = vmatpush1.bf16.msra.mxu0 0
    %175 = vmatprep.subr.bf16.mxu0 0
    %176 = vmatpush1.bf16.msra.mxu0 0
    %177 = vmatprep.subr.bf16.mxu0 0
    %178 = vmatpush1.bf16.msra.mxu0 0
    %179 = vmatprep.subr.bf16.mxu0 0
    %180 = vmatpush1.bf16.msra.mxu0 0
    %181 = vmatprep.subr.bf16.mxu0 0
    %182 = vmatpush1.bf16.msra.mxu0 0
    %183 = vmatprep.subr.bf16.mxu0 0
    %184 = vmatpush1.bf16.msra.mxu0 0
    %185 = vmatprep.subr.bf16.mxu0 0
    %186 = vmatpush1.bf16.msra.mxu0 0
    %187 = vmatprep.subr.bf16.mxu0 0
    %188 = vmatpush1.bf16.msra.mxu0 0
    %189 = vmatprep.subr.bf16.mxu0 0
    %190 = vmatpush1.bf16.msra.mxu0 0
    %191 = vmatprep.subr.bf16.mxu0 0
    %192 = vmatpush1.bf16.msra.mxu0 0
    %193 = vmatprep.subr.bf16.mxu0 0
    %194 = vmatpush1.bf16.msra.mxu0 0
    %195 = vmatprep.mubr.bf16.mxu0 0
    %196 = vmatmul.mubr.bf16.gmra.mrb[0].mxu0 %v151
    %v197 = vpop.f32.mrb[0].mxu0
    %v198 = vadd.f32 %v85, %v197
    %v199 = vpop.f32.mrb[0].mxu0
    %v200 = vadd.f32 %v89, %v199
    %v201 = vpop.f32.mrb[0].mxu0
    %v202 = vpop.f32.mrb[0].mxu0
    %203 = vdwg.mxu0
    %204 = vmatprep.subr.bf16.mxu0 0
    %205 = vmatpush1.bf16.msra.mxu0 %v142
    %206 = vmatprep.subr.bf16.mxu0 0
    %207 = vmatpush1.bf16.msra.mxu0 %v161
    %208 = vmatprep.subr.bf16.mxu0 0
    %209 = vmatpush1.bf16.msra.mxu0 0
    %210 = vmatprep.subr.bf16.mxu0 0
    %211 = vmatpush1.bf16.msra.mxu0 0
    %212 = vmatprep.subr.bf16.mxu0 0
    %213 = vmatpush1.bf16.msra.mxu0 0
    %214 = vmatprep.subr.bf16.mxu0 0
    %215 = vmatpush1.bf16.msra.mxu0 0
    %216 = vmatprep.subr.bf16.mxu0 0
    %217 = vmatpush1.bf16.msra.mxu0 0
    %218 = vmatprep.subr.bf16.mxu0 0
    %219 = vmatpush1.bf16.msra.mxu0 0
    %220 = vmatprep.subr.bf16.mxu0 0
    %221 = vmatpush1.bf16.msra.mxu0 0
    %222 = vmatprep.subr.bf16.mxu0 0
    %223 = vmatpush1.bf16.msra.mxu0 0
    %224 = vmatprep.subr.bf16.mxu0 0
    %225 = vmatpush1.bf16.msra.mxu0 0
    %226 = vmatprep.subr.bf16.mxu0 0
    %227 = vmatpush1.bf16.msra.mxu0 0
    %228 = vmatprep.subr.bf16.mxu0 0
    %229 = vmatpush1.bf16.msra.mxu0 0
    %230 = vmatprep.subr.bf16.mxu0 0
    %231 = vmatpush1.bf16.msra.mxu0 0
    %232 = vmatprep.subr.bf16.mxu0 0
    %233 = vmatpush1.bf16.msra.mxu0 0
    %234 = vmatprep.subr.bf16.mxu0 0
    %235 = vmatpush1.bf16.msra.mxu0 0
    %236 = vmatprep.mubr.bf16.mxu0 0
    %237 = vmatmul.mubr.bf16.gmra.mrb[0].mxu0 %v151
    %v238 = vpop.f32.mrb[0].mxu0
    %v239 = vadd.f32 %v93, %v238
    %v240 = vpop.f32.mrb[0].mxu0
    %v241 = vpop.f32.mrb[0].mxu0
    %v242 = vpop.f32.mrb[0].mxu0
    %243 = vdwg.mxu0
    %v244 = vmax.f32 %v198, 0.0
    %v245 = vmax.f32 %v200, 0.0
    %v246 = vmax.f32 %v239, 0.0
    %v247 = vpack.c.bf16 %v244, %v244
    %v248 = vpack.c.bf16 %v245, %v245
    %v249 = vpack.c.bf16 %v246, %v246
    %v250 = vld [vmem:[#allocation6] sm:$0xff]
    %v251 = vld [vmem:[#allocation6 + $0x8] sm:$0xf]
    %v252 = vld [vmem:[#allocation6 + $0xc] sm:$0xff]
    %v253 = vld [vmem:[#allocation6 + $0x14] sm:$0xf]
    %v254 = vld [vmem:[#allocation6 + $0x18] sm:$0xff]
    %v255 = vld [vmem:[#allocation6 + $0x20] sm:$0xf]
    %v256 = vld [vmem:[#allocation6 + $0x24] sm:$0xff]
    %v257 = vld [vmem:[#allocation6 + $0x2c] sm:$0xf]
    %v258 = vld [vmem:[#allocation6 + $0x30] sm:$0xff]
    %v259 = vld [vmem:[#allocation6 + $0x38] sm:$0xf]
    %v260 = vld [vmem:[#allocation6 + $0x3c] sm:$0xff]
    %v261 = vld [vmem:[#allocation6 + $0x44] sm:$0xf]
    %v262 = vld [vmem:[#allocation6 + $0x48] sm:$0xff]
    %v263 = vld [vmem:[#allocation6 + $0x50] sm:$0xf]
    %v264 = vld [vmem:[#allocation6 + $0x54] sm:$0xff]
    %v265 = vld [vmem:[#allocation6 + $0x5c] sm:$0xf]
    %v266 = vld [vmem:[#allocation6 + $0x60] sm:$0xff]
    %v267 = vld [vmem:[#allocation6 + $0x68] sm:$0xf]
    %v268 = vld [vmem:[#allocation6 + $0x6c] sm:$0xff]
    %v269 = vld [vmem:[#allocation6 + $0x74] sm:$0xf]
    %v270 = vld [vmem:[#allocation6 + $0x78] sm:$0xff]
    %v271 = vld [vmem:[#allocation6 + $0x80] sm:$0xf]
    %v272 = vld [vmem:[#allocation6 + $0x84] sm:$0xff]
    %v273 = vld [vmem:[#allocation6 + $0x8c] sm:$0xf]
    %v274 = vld [vmem:[#allocation6 + $0x90] sm:$0xff]
    %v275 = vld [vmem:[#allocation6 + $0x98] sm:$0xf]
    %v276 = vld [vmem:[#allocation6 + $0x9c] sm:$0xff]
    %v277 = vld [vmem:[#allocation6 + $0xa4] sm:$0xf]
    %v278 = vld [vmem:[#allocation6 + $0xa8] sm:$0xff]
    %v279 = vld [vmem:[#allocation6 + $0xb0] sm:$0xf]
    %v280 = vld [vmem:[#allocation6 + $0xb4] sm:$0xff]
    %v281 = vld [vmem:[#allocation6 + $0xbc] sm:$0xf]
    %v282 = vld [vmem:[#allocation6 + $0xc0] sm:$0xff]
    %v283 = vld [vmem:[#allocation6 + $0xc8] sm:$0xf]
    %v284 = vld [vmem:[#allocation6 + $0xcc] sm:$0xff]
    %v285 = vld [vmem:[#allocation6 + $0xd4] sm:$0xf]
    %v286 = vld [vmem:[#allocation6 + $0xd8] sm:$0xff]
    %v287 = vld [vmem:[#allocation6 + $0xe0] sm:$0xf]
    %v288 = vld [vmem:[#allocation6 + $0xe4] sm:$0xff]
    %v289 = vld [vmem:[#allocation6 + $0xec] sm:$0xf]
    %v290 = vld [vmem:[#allocation6 + $0xf0] sm:$0xff]
    %v291 = vld [vmem:[#allocation6 + $0xf8] sm:$0xf]
    %v292 = vld [vmem:[#allocation6 + $0xfc] sm:$0xff]
    %v293 = vld [vmem:[#allocation6 + $0x104] sm:$0xf]
    %v294 = vld [vmem:[#allocation6 + $0x108] sm:$0xff]
    %v295 = vld [vmem:[#allocation6 + $0x110] sm:$0xf]
    %v296 = vld [vmem:[#allocation6 + $0x114] sm:$0xff]
    %v297 = vld [vmem:[#allocation6 + $0x11c] sm:$0xf]
    %v298 = vld [vmem:[#allocation6 + $0x120] sm:$0xff]
    %v299 = vld [vmem:[#allocation6 + $0x128] sm:$0xf]
    %v300 = vld [vmem:[#allocation6 + $0x12c] sm:$0xff]
    %v301 = vld [vmem:[#allocation6 + $0x134] sm:$0xf]
    %v302 = vld [vmem:[#allocation6 + $0x138] sm:$0xff]
    %v303 = vld [vmem:[#allocation6 + $0x140] sm:$0xf]
    %v304 = vld [vmem:[#allocation6 + $0x144] sm:$0xff]
    %v305 = vld [vmem:[#allocation6 + $0x14c] sm:$0xf]
    %v306 = vld [vmem:[#allocation6 + $0x150] sm:$0xff]
    %v307 = vld [vmem:[#allocation6 + $0x158] sm:$0xf]
    %v308 = vld [vmem:[#allocation6 + $0x15c] sm:$0xff]
    %v309 = vld [vmem:[#allocation6 + $0x164] sm:$0xf]
    %v310 = vld [vmem:[#allocation6 + $0x168] sm:$0xff]
    %v311 = vld [vmem:[#allocation6 + $0x170] sm:$0xf]
    %v312 = vld [vmem:[#allocation6 + $0x174] sm:$0xff]
    %v313 = vld [vmem:[#allocation6 + $0x17c] sm:$0xf]
    %v314 = vld [vmem:[#allocation6 + $0x180] sm:$0xff]
    %v315 = vld [vmem:[#allocation6 + $0x188] sm:$0xf]
    %v316 = vld [vmem:[#allocation6 + $0x18c] sm:$0xff]
    %v317 = vld [vmem:[#allocation6 + $0x194] sm:$0xf]
    %v318 = vld [vmem:[#allocation6 + $0x198] sm:$0xff]
    %v319 = vld [vmem:[#allocation6 + $0x1a0] sm:$0xf]
    %v320 = vld [vmem:[#allocation6 + $0x1a4] sm:$0xff]
    %v321 = vld [vmem:[#allocation6 + $0x1ac] sm:$0xf]
    %v322 = vld [vmem:[#allocation6 + $0x1b0] sm:$0xff]
    %v323 = vld [vmem:[#allocation6 + $0x1b8] sm:$0xf]
    %v324 = vld [vmem:[#allocation6 + $0x1bc] sm:$0xff]
    %v325 = vld [vmem:[#allocation6 + $0x1c4] sm:$0xf]
    %v326 = vld [vmem:[#allocation6 + $0x1c8] sm:$0xff]
    %v327 = vld [vmem:[#allocation6 + $0x1d0] sm:$0xf]
    %v328 = vld [vmem:[#allocation6 + $0x1d4] sm:$0xff]
    %v329 = vld [vmem:[#allocation6 + $0x1dc] sm:$0xf]
    %v330 = vld [vmem:[#allocation6 + $0x1e0] sm:$0xff]
    %v331 = vld [vmem:[#allocation6 + $0x1e8] sm:$0xf]
    %v332 = vld [vmem:[#allocation6 + $0x1ec] sm:$0xff]
    %v333 = vld [vmem:[#allocation6 + $0x1f4] sm:$0xf]
    %v334 = vld [vmem:[#allocation6 + $0x1f8] sm:$0xff]
    %v335 = vld [vmem:[#allocation6 + $0x200] sm:$0xf]
    %v336 = vld [vmem:[#allocation6 + $0x204] sm:$0xff]
    %v337 = vld [vmem:[#allocation6 + $0x20c] sm:$0xf]
    %v338 = vld [vmem:[#allocation6 + $0x210] sm:$0xff]
    %v339 = vld [vmem:[#allocation6 + $0x218] sm:$0xf]
    %v340 = vld [vmem:[#allocation6 + $0x21c] sm:$0xff]
    %v341 = vld [vmem:[#allocation6 + $0x224] sm:$0xf]
    %v342 = vld [vmem:[#allocation6 + $0x228] sm:$0xff]
    %v343 = vld [vmem:[#allocation6 + $0x230] sm:$0xf]
    %v344 = vld [vmem:[#allocation6 + $0x234] sm:$0xff]
    %v345 = vld [vmem:[#allocation6 + $0x23c] sm:$0xf]
    %v347 = vlaneseq
    %v348 = vshrl.u32 %v347, 7
    %v349 = vsub.s32 0, %v348
    %v350 = vrot.slane %v69, %v349
    %v351 = vlaneseq
    %v352 = vshrl.u32 %v351, 7
    %v353 = vsub.s32 1, %v352
    %v354 = vrot.slane %v69, %v353
    %v355 = vlaneseq
    %v356 = vshrl.u32 %v355, 7
    %v357 = vsub.s32 2, %v356
    %v358 = vrot.slane %v69, %v357
    %v458 = vunpack.c.l.b16 %v250
    %v459 = vunpack.c.h.b16 %v250
    %v460 = vunpack.c.l.b16 %v251
    %v461 = vunpack.c.l.b16 %v252
    %v462 = vunpack.c.h.b16 %v252
    %v463 = vunpack.c.l.b16 %v253
    %v464 = vunpack.c.l.b16 %v254
    %v465 = vunpack.c.h.b16 %v254
    %v466 = vunpack.c.l.b16 %v255
    %v467 = vunpack.c.l.b16 %v256
    %v468 = vunpack.c.h.b16 %v256
    %v469 = vunpack.c.l.b16 %v257
    %v470 = vunpack.c.l.b16 %v258
    %v471 = vunpack.c.h.b16 %v258
    %v472 = vunpack.c.l.b16 %v259
    %v473 = vunpack.c.l.b16 %v260
    %v474 = vunpack.c.h.b16 %v260
    %v475 = vunpack.c.l.b16 %v261
    %v476 = vunpack.c.l.b16 %v262
    %v477 = vunpack.c.h.b16 %v262
    %v478 = vunpack.c.l.b16 %v263
    %v479 = vunpack.c.l.b16 %v264
    %v480 = vunpack.c.h.b16 %v264
    %v481 = vunpack.c.l.b16 %v265
    %v482 = vunpack.c.l.b16 %v266
    %v483 = vunpack.c.h.b16 %v266
    %v484 = vunpack.c.l.b16 %v267
    %v485 = vunpack.c.l.b16 %v268
    %v486 = vunpack.c.h.b16 %v268
    %v487 = vunpack.c.l.b16 %v269
    %v488 = vunpack.c.l.b16 %v270
    %v489 = vunpack.c.h.b16 %v270
    %v490 = vunpack.c.l.b16 %v271
    %v491 = vunpack.c.l.b16 %v272
    %v492 = vunpack.c.h.b16 %v272
    %v493 = vunpack.c.l.b16 %v273
    %v494 = vunpack.c.l.b16 %v274
    %v495 = vunpack.c.h.b16 %v274
    %v496 = vunpack.c.l.b16 %v275
    %v497 = vunpack.c.l.b16 %v276
    %v498 = vunpack.c.h.b16 %v276
    %v499 = vunpack.c.l.b16 %v277
    %v500 = vunpack.c.l.b16 %v278
    %v501 = vunpack.c.h.b16 %v278
    %v502 = vunpack.c.l.b16 %v279
    %v503 = vunpack.c.l.b16 %v280
    %v504 = vunpack.c.h.b16 %v280
    %v505 = vunpack.c.l.b16 %v281
    %v506 = vunpack.c.l.b16 %v282
    %v507 = vunpack.c.h.b16 %v282
    %v508 = vunpack.c.l.b16 %v283
    %v509 = vunpack.c.l.b16 %v284
    %v510 = vunpack.c.h.b16 %v284
    %v511 = vunpack.c.l.b16 %v285
    %v512 = vunpack.c.l.b16 %v286
    %v513 = vunpack.c.h.b16 %v286
    %v514 = vunpack.c.l.b16 %v287
    %v515 = vunpack.c.l.b16 %v288
    %v516 = vunpack.c.h.b16 %v288
    %v517 = vunpack.c.l.b16 %v289
    %v518 = vunpack.c.l.b16 %v290
    %v519 = vunpack.c.h.b16 %v290
    %v520 = vunpack.c.l.b16 %v291
    %v521 = vunpack.c.l.b16 %v292
    %v522 = vunpack.c.h.b16 %v292
    %v523 = vunpack.c.l.b16 %v293
    %v524 = vunpack.c.l.b16 %v294
    %v525 = vunpack.c.h.b16 %v294
    %v526 = vunpack.c.l.b16 %v295
    %v527 = vunpack.c.l.b16 %v296
    %v528 = vunpack.c.h.b16 %v296
    %v529 = vunpack.c.l.b16 %v297
    %v530 = vunpack.c.l.b16 %v298
    %v531 = vunpack.c.h.b16 %v298
    %v532 = vunpack.c.l.b16 %v299
    %v533 = vunpack.c.l.b16 %v300
    %v534 = vunpack.c.h.b16 %v300
    %v535 = vunpack.c.l.b16 %v301
    %v536 = vunpack.c.l.b16 %v302
    %v537 = vunpack.c.h.b16 %v302
    %v538 = vunpack.c.l.b16 %v303
    %v539 = vunpack.c.l.b16 %v304
    %v540 = vunpack.c.h.b16 %v304
    %v541 = vunpack.c.l.b16 %v305
    %v542 = vunpack.c.l.b16 %v306
    %v543 = vunpack.c.h.b16 %v306
    %v544 = vunpack.c.l.b16 %v307
    %v545 = vunpack.c.l.b16 %v308
    %v546 = vunpack.c.h.b16 %v308
    %v547 = vunpack.c.l.b16 %v309
    %v548 = vunpack.c.l.b16 %v310
    %v549 = vunpack.c.h.b16 %v310
    %v550 = vunpack.c.l.b16 %v311
    %v551 = vunpack.c.l.b16 %v312
    %v552 = vunpack.c.h.b16 %v312
    %v553 = vunpack.c.l.b16 %v313
    %v554 = vunpack.c.l.b16 %v314
    %v555 = vunpack.c.h.b16 %v314
    %v556 = vunpack.c.l.b16 %v315
    %v557 = vunpack.c.l.b16 %v316
    %v558 = vunpack.c.h.b16 %v316
    %v559 = vunpack.c.l.b16 %v317
    %v560 = vunpack.c.l.b16 %v318
    %v561 = vunpack.c.h.b16 %v318
    %v562 = vunpack.c.l.b16 %v319
    %v563 = vunpack.c.l.b16 %v320
    %v564 = vunpack.c.h.b16 %v320
    %v565 = vunpack.c.l.b16 %v321
    %v566 = vunpack.c.l.b16 %v322
    %v567 = vunpack.c.h.b16 %v322
    %v568 = vunpack.c.l.b16 %v323
    %v569 = vunpack.c.l.b16 %v324
    %v570 = vunpack.c.h.b16 %v324
    %v571 = vunpack.c.l.b16 %v325
    %v572 = vunpack.c.l.b16 %v326
    %v573 = vunpack.c.h.b16 %v326
    %v574 = vunpack.c.l.b16 %v327
    %v575 = vunpack.c.l.b16 %v328
    %v576 = vunpack.c.h.b16 %v328
    %v577 = vunpack.c.l.b16 %v329
    %v578 = vunpack.c.l.b16 %v330
    %v579 = vunpack.c.h.b16 %v330
    %v580 = vunpack.c.l.b16 %v331
    %v581 = vunpack.c.l.b16 %v332
    %v582 = vunpack.c.h.b16 %v332
    %v583 = vunpack.c.l.b16 %v333
    %v584 = vunpack.c.l.b16 %v334
    %v585 = vunpack.c.h.b16 %v334
    %v586 = vunpack.c.l.b16 %v335
    %v587 = vunpack.c.l.b16 %v336
    %v588 = vunpack.c.h.b16 %v336
    %v589 = vunpack.c.l.b16 %v337
    %v590 = vunpack.c.l.b16 %v338
    %v591 = vunpack.c.h.b16 %v338
    %v592 = vunpack.c.l.b16 %v339
    %v593 = vunpack.c.l.b16 %v340
    %v594 = vunpack.c.h.b16 %v340
    %v595 = vunpack.c.l.b16 %v341
    %v596 = vunpack.c.l.b16 %v342
    %v597 = vunpack.c.h.b16 %v342
    %v598 = vunpack.c.l.b16 %v343
    %v599 = vunpack.c.l.b16 %v344
    %v600 = vunpack.c.h.b16 %v344
    %v601 = vunpack.c.l.b16 %v345
    %v602 = vpack.c.b16 %v461, %v458
    %v603 = vpack.c.b16 %v462, %v459
    %v604 = vpack.c.b16 %v463, %v460
    %v605 = vpack.c.b16 %v467, %v464
    %v606 = vpack.c.b16 %v468, %v465
    %v607 = vpack.c.b16 %v469, %v466
    %v608 = vpack.c.b16 %v473, %v470
    %v609 = vpack.c.b16 %v474, %v471
    %v610 = vpack.c.b16 %v475, %v472
    %v611 = vpack.c.b16 %v479, %v476
    %v612 = vpack.c.b16 %v480, %v477
    %v613 = vpack.c.b16 %v481, %v478
    %v614 = vpack.c.b16 %v485, %v482
    %v615 = vpack.c.b16 %v486, %v483
    %v616 = vpack.c.b16 %v487, %v484
    %v617 = vpack.c.b16 %v491, %v488
    %v618 = vpack.c.b16 %v492, %v489
    %v619 = vpack.c.b16 %v493, %v490
    %v620 = vpack.c.b16 %v497, %v494
    %v621 = vpack.c.b16 %v498, %v495
    %v622 = vpack.c.b16 %v499, %v496
    %v623 = vpack.c.b16 %v503, %v500
    %v624 = vpack.c.b16 %v504, %v501
    %v625 = vpack.c.b16 %v505, %v502
    %v626 = vpack.c.b16 %v509, %v506
    %v627 = vpack.c.b16 %v510, %v507
    %v628 = vpack.c.b16 %v511, %v508
    %v629 = vpack.c.b16 %v515, %v512
    %v630 = vpack.c.b16 %v516, %v513
    %v631 = vpack.c.b16 %v517, %v514
    %v632 = vpack.c.b16 %v521, %v518
    %v633 = vpack.c.b16 %v522, %v519
    %v634 = vpack.c.b16 %v523, %v520
    %v635 = vpack.c.b16 %v527, %v524
    %v636 = vpack.c.b16 %v528, %v525
    %v637 = vpack.c.b16 %v529, %v526
    %v638 = vpack.c.b16 %v533, %v530
    %v639 = vpack.c.b16 %v534, %v531
    %v640 = vpack.c.b16 %v535, %v532
    %v641 = vpack.c.b16 %v539, %v536
    %v642 = vpack.c.b16 %v540, %v537
    %v643 = vpack.c.b16 %v541, %v538
    %v644 = vpack.c.b16 %v545, %v542
    %v645 = vpack.c.b16 %v546, %v543
    %v646 = vpack.c.b16 %v547, %v544
    %v647 = vpack.c.b16 %v551, %v548
    %v648 = vpack.c.b16 %v552, %v549
    %v649 = vpack.c.b16 %v553, %v550
    %v650 = vpack.c.b16 %v557, %v554
    %v651 = vpack.c.b16 %v558, %v555
    %v652 = vpack.c.b16 %v559, %v556
    %v653 = vpack.c.b16 %v563, %v560
    %v654 = vpack.c.b16 %v564, %v561
    %v655 = vpack.c.b16 %v565, %v562
    %v656 = vpack.c.b16 %v569, %v566
    %v657 = vpack.c.b16 %v570, %v567
    %v658 = vpack.c.b16 %v571, %v568
    %v659 = vpack.c.b16 %v575, %v572
    %v660 = vpack.c.b16 %v576, %v573
    %v661 = vpack.c.b16 %v577, %v574
    %v662 = vpack.c.b16 %v581, %v578
    %v663 = vpack.c.b16 %v582, %v579
    %v664 = vpack.c.b16 %v583, %v580
    %v665 = vpack.c.b16 %v587, %v584
    %v666 = vpack.c.b16 %v588, %v585
    %v667 = vpack.c.b16 %v589, %v586
    %v668 = vpack.c.b16 %v593, %v590
    %v669 = vpack.c.b16 %v594, %v591
    %v670 = vpack.c.b16 %v595, %v592
    %v671 = vpack.c.b16 %v599, %v596
    %v672 = vpack.c.b16 %v600, %v597
    %v673 = vpack.c.b16 %v601, %v598
    %746 = vmatprep.subr.bf16.mxu0 %v603
    %747 = vmatpush1.bf16.msra.mxu0 %v602
    %748 = vmatprep.subr.bf16.mxu0 %v606
    %749 = vmatpush1.bf16.msra.mxu0 %v605
    %750 = vmatprep.subr.bf16.mxu0 %v609
    %751 = vmatpush1.bf16.msra.mxu0 %v608
    %752 = vmatprep.subr.bf16.mxu0 %v612
    %753 = vmatpush1.bf16.msra.mxu0 %v611
    %754 = vmatprep.subr.bf16.mxu0 %v615
    %755 = vmatpush1.bf16.msra.mxu0 %v614
    %756 = vmatprep.subr.bf16.mxu0 %v618
    %757 = vmatpush1.bf16.msra.mxu0 %v617
    %758 = vmatprep.subr.bf16.mxu0 %v621
    %759 = vmatpush1.bf16.msra.mxu0 %v620
    %760 = vmatprep.subr.bf16.mxu0 %v624
    %761 = vmatpush1.bf16.msra.mxu0 %v623
    %762 = vmatprep.subr.bf16.mxu0 %v627
    %763 = vmatpush1.bf16.msra.mxu0 %v626
    %764 = vmatprep.subr.bf16.mxu0 %v630
    %765 = vmatpush1.bf16.msra.mxu0 %v629
    %766 = vmatprep.subr.bf16.mxu0 %v633
    %767 = vmatpush1.bf16.msra.mxu0 %v632
    %768 = vmatprep.subr.bf16.mxu0 %v636
    %769 = vmatpush1.bf16.msra.mxu0 %v635
    %770 = vmatprep.subr.bf16.mxu0 %v639
    %771 = vmatpush1.bf16.msra.mxu0 %v638
    %772 = vmatprep.subr.bf16.mxu0 %v642
    %773 = vmatpush1.bf16.msra.mxu0 %v641
    %774 = vmatprep.subr.bf16.mxu0 %v645
    %775 = vmatpush1.bf16.msra.mxu0 %v644
    %776 = vmatprep.subr.bf16.mxu0 %v648
    %777 = vmatpush1.bf16.msra.mxu0 %v647
    %778 = vmatprep.mubr.bf16.mxu0 %v248
    %779 = vmatmul.mubr.bf16.gmra.mrb[0].mxu0 %v247
    %v780 = vpop.f32.mrb[0].mxu0
    %v781 = vadd.f32 %v350, %v780
    %v782 = vpop.f32.mrb[0].mxu0
    %v783 = vadd.f32 %v354, %v782
    %v784 = vpop.f32.mrb[0].mxu0
    %v785 = vpop.f32.mrb[0].mxu0
    %786 = vdwg.mxu0
    %787 = vmatprep.subr.bf16.mxu0 %v651
    %788 = vmatpush1.bf16.msra.mxu0 %v650
    %789 = vmatprep.subr.bf16.mxu0 %v654
    %790 = vmatpush1.bf16.msra.mxu0 %v653
    %791 = vmatprep.subr.bf16.mxu0 %v657
    %792 = vmatpush1.bf16.msra.mxu0 %v656
    %793 = vmatprep.subr.bf16.mxu0 %v660
    %794 = vmatpush1.bf16.msra.mxu0 %v659
    %795 = vmatprep.subr.bf16.mxu0 %v663
    %796 = vmatpush1.bf16.msra.mxu0 %v662
    %797 = vmatprep.subr.bf16.mxu0 %v666
    %798 = vmatpush1.bf16.msra.mxu0 %v665
    %799 = vmatprep.subr.bf16.mxu0 %v669
    %800 = vmatpush1.bf16.msra.mxu0 %v668
    %801 = vmatprep.subr.bf16.mxu0 %v672
    %802 = vmatpush1.bf16.msra.mxu0 %v671
    %803 = vmatprep.subr.bf16.mxu0 0
    %804 = vmatpush1.bf16.msra.mxu0 0
    %805 = vmatprep.subr.bf16.mxu0 0
    %806 = vmatpush1.bf16.msra.mxu0 0
    %807 = vmatprep.subr.bf16.mxu0 0
    %808 = vmatpush1.bf16.msra.mxu0 0
    %809 = vmatprep.subr.bf16.mxu0 0
    %810 = vmatpush1.bf16.msra.mxu0 0
    %811 = vmatprep.subr.bf16.mxu0 0
    %812 = vmatpush1.bf16.msra.mxu0 0
    %813 = vmatprep.subr.bf16.mxu0 0
    %814 = vmatpush1.bf16.msra.mxu0 0
    %815 = vmatprep.subr.bf16.mxu0 0
    %816 = vmatpush1.bf16.msra.mxu0 0
    %817 = vmatprep.subr.bf16.mxu0 0
    %818 = vmatpush1.bf16.msra.mxu0 0
    %819 = vmatprep.mubr.bf16.mxu0 0
    %820 = vmatmul.mubr.bf16.gmra.mrb[0].mxu0 %v249
    %v821 = vpop.f32.mrb[0].mxu0
    %v822 = vadd.f32 %v781, %v821
    %v823 = vpop.f32.mrb[0].mxu0
    %v824 = vadd.f32 %v783, %v823
    %v825 = vpop.f32.mrb[0].mxu0
    %v826 = vpop.f32.mrb[0].mxu0
    %827 = vdwg.mxu0
    %828 = vmatprep.subr.bf16.mxu0 0
    %829 = vmatpush1.bf16.msra.mxu0 %v604
    %830 = vmatprep.subr.bf16.mxu0 0
    %831 = vmatpush1.bf16.msra.mxu0 %v607
    %832 = vmatprep.subr.bf16.mxu0 0
    %833 = vmatpush1.bf16.msra.mxu0 %v610
    %834 = vmatprep.subr.bf16.mxu0 0
    %835 = vmatpush1.bf16.msra.mxu0 %v613
    %836 = vmatprep.subr.bf16.mxu0 0
    %837 = vmatpush1.bf16.msra.mxu0 %v616
    %838 = vmatprep.subr.bf16.mxu0 0
    %839 = vmatpush1.bf16.msra.mxu0 %v619
    %840 = vmatprep.subr.bf16.mxu0 0
    %841 = vmatpush1.bf16.msra.mxu0 %v622
    %842 = vmatprep.subr.bf16.mxu0 0
    %843 = vmatpush1.bf16.msra.mxu0 %v625
    %844 = vmatprep.subr.bf16.mxu0 0
    %845 = vmatpush1.bf16.msra.mxu0 %v628
    %846 = vmatprep.subr.bf16.mxu0 0
    %847 = vmatpush1.bf16.msra.mxu0 %v631
    %848 = vmatprep.subr.bf16.mxu0 0
    %849 = vmatpush1.bf16.msra.mxu0 %v634
    %850 = vmatprep.subr.bf16.mxu0 0
    %851 = vmatpush1.bf16.msra.mxu0 %v637
    %852 = vmatprep.subr.bf16.mxu0 0
    %853 = vmatpush1.bf16.msra.mxu0 %v640
    %854 = vmatprep.subr.bf16.mxu0 0
    %855 = vmatpush1.bf16.msra.mxu0 %v643
    %856 = vmatprep.subr.bf16.mxu0 0
    %857 = vmatpush1.bf16.msra.mxu0 %v646
    %858 = vmatprep.subr.bf16.mxu0 0
    %859 = vmatpush1.bf16.msra.mxu0 %v649
    %860 = vmatprep.mubr.bf16.mxu0 %v248
    %861 = vmatmul.mubr.bf16.gmra.mrb[0].mxu0 %v247
    %v862 = vpop.f32.mrb[0].mxu0
    %v863 = vadd.f32 %v358, %v862
    %v864 = vpop.f32.mrb[0].mxu0
    %v865 = vpop.f32.mrb[0].mxu0
    %v866 = vpop.f32.mrb[0].mxu0
    %867 = vdwg.mxu0
    %868 = vmatprep.subr.bf16.mxu0 0
    %869 = vmatpush1.bf16.msra.mxu0 %v652
    %870 = vmatprep.subr.bf16.mxu0 0
    %871 = vmatpush1.bf16.msra.mxu0 %v655
    %872 = vmatprep.subr.bf16.mxu0 0
    %873 = vmatpush1.bf16.msra.mxu0 %v658
    %874 = vmatprep.subr.bf16.mxu0 0
    %875 = vmatpush1.bf16.msra.mxu0 %v661
    %876 = vmatprep.subr.bf16.mxu0 0
    %877 = vmatpush1.bf16.msra.mxu0 %v664
    %878 = vmatprep.subr.bf16.mxu0 0
    %879 = vmatpush1.bf16.msra.mxu0 %v667
    %880 = vmatprep.subr.bf16.mxu0 0
    %881 = vmatpush1.bf16.msra.mxu0 %v670
    %882 = vmatprep.subr.bf16.mxu0 0
    %883 = vmatpush1.bf16.msra.mxu0 %v673
    %884 = vmatprep.subr.bf16.mxu0 0
    %885 = vmatpush1.bf16.msra.mxu0 0
    %886 = vmatprep.subr.bf16.mxu0 0
    %887 = vmatpush1.bf16.msra.mxu0 0
    %888 = vmatprep.subr.bf16.mxu0 0
    %889 = vmatpush1.bf16.msra.mxu0 0
    %890 = vmatprep.subr.bf16.mxu0 0
    %891 = vmatpush1.bf16.msra.mxu0 0
    %892 = vmatprep.subr.bf16.mxu0 0
    %893 = vmatpush1.bf16.msra.mxu0 0
    %894 = vmatprep.subr.bf16.mxu0 0
    %895 = vmatpush1.bf16.msra.mxu0 0
    %896 = vmatprep.subr.bf16.mxu0 0
    %897 = vmatpush1.bf16.msra.mxu0 0
    %898 = vmatprep.subr.bf16.mxu0 0
    %899 = vmatpush1.bf16.msra.mxu0 0
    %900 = vmatprep.mubr.bf16.mxu0 0
    %901 = vmatmul.mubr.bf16.gmra.mrb[0].mxu0 %v249
    %v902 = vpop.f32.mrb[0].mxu0
    %v903 = vadd.f32 %v863, %v902
    %v904 = vpop.f32.mrb[0].mxu0
    %v905 = vpop.f32.mrb[0].mxu0
    %v906 = vpop.f32.mrb[0].mxu0
    %907 = vdwg.mxu0
    %v908 = vmax.f32 %v822, 0.0
    %v909 = vmax.f32 %v824, 0.0
    %v910 = vmax.f32 %v903, 0.0
    %v911 = vpack.c.bf16 %v908, %v908
    %v912 = vpack.c.bf16 %v909, %v909
    %v913 = vpack.c.bf16 %v910, %v910
    %v914 = vld [vmem:[#allocation8] sm:$0xf]
    %v915 = vld [vmem:[#allocation8 + $0x4] sm:$0xf]
    %v916 = vld [vmem:[#allocation8 + $0x8] sm:$0xf]
    %v917 = vld [vmem:[#allocation8 + $0xc] sm:$0xf]
    %v918 = vld [vmem:[#allocation8 + $0x10] sm:$0xf]
    %v919 = vld [vmem:[#allocation8 + $0x14] sm:$0xf]
    %v920 = vld [vmem:[#allocation8 + $0x18] sm:$0xf]
    %v921 = vld [vmem:[#allocation8 + $0x1c] sm:$0xf]
    %v922 = vld [vmem:[#allocation8 + $0x20] sm:$0xf]
    %v923 = vld [vmem:[#allocation8 + $0x24] sm:$0xf]
    %v924 = vld [vmem:[#allocation8 + $0x28] sm:$0xf]
    %v925 = vld [vmem:[#allocation8 + $0x2c] sm:$0xf]
    %v926 = vld [vmem:[#allocation8 + $0x30] sm:$0xf]
    %v927 = vld [vmem:[#allocation8 + $0x34] sm:$0xf]
    %v928 = vld [vmem:[#allocation8 + $0x38] sm:$0xf]
    %v929 = vld [vmem:[#allocation8 + $0x3c] sm:$0xf]
    %v930 = vld [vmem:[#allocation8 + $0x40] sm:$0xf]
    %v931 = vld [vmem:[#allocation8 + $0x44] sm:$0xf]
    %v932 = vld [vmem:[#allocation8 + $0x48] sm:$0xf]
    %v933 = vld [vmem:[#allocation8 + $0x4c] sm:$0xf]
    %v934 = vld [vmem:[#allocation8 + $0x50] sm:$0xf]
    %v935 = vld [vmem:[#allocation8 + $0x54] sm:$0xf]
    %v936 = vld [vmem:[#allocation8 + $0x58] sm:$0xf]
    %v937 = vld [vmem:[#allocation8 + $0x5c] sm:$0xf]
    %v938 = vld [vmem:[#allocation8 + $0x60] sm:$0xf]
    %v939 = vld [vmem:[#allocation8 + $0x64] sm:$0xf]
    %v940 = vld [vmem:[#allocation8 + $0x68] sm:$0xf]
    %v941 = vld [vmem:[#allocation8 + $0x6c] sm:$0xf]
    %v942 = vld [vmem:[#allocation8 + $0x70] sm:$0xf]
    %v943 = vld [vmem:[#allocation8 + $0x74] sm:$0xf]
    %v944 = vld [vmem:[#allocation8 + $0x78] sm:$0xf]
    %v945 = vld [vmem:[#allocation8 + $0x7c] sm:$0xf]
    %v946 = vld [vmem:[#allocation8 + $0x80] sm:$0xf]
    %v947 = vld [vmem:[#allocation8 + $0x84] sm:$0xf]
    %v948 = vld [vmem:[#allocation8 + $0x88] sm:$0xf]
    %v949 = vld [vmem:[#allocation8 + $0x8c] sm:$0xf]
    %v950 = vld [vmem:[#allocation8 + $0x90] sm:$0xf]
    %v951 = vld [vmem:[#allocation8 + $0x94] sm:$0xf]
    %v952 = vld [vmem:[#allocation8 + $0x98] sm:$0xf]
    %v953 = vld [vmem:[#allocation8 + $0x9c] sm:$0xf]
    %v954 = vld [vmem:[#allocation8 + $0xa0] sm:$0xf]
    %v955 = vld [vmem:[#allocation8 + $0xa4] sm:$0xf]
    %v956 = vld [vmem:[#allocation8 + $0xa8] sm:$0xf]
    %v957 = vld [vmem:[#allocation8 + $0xac] sm:$0xf]
    %v958 = vld [vmem:[#allocation8 + $0xb0] sm:$0xf]
    %v959 = vld [vmem:[#allocation8 + $0xb4] sm:$0xf]
    %v960 = vld [vmem:[#allocation8 + $0xb8] sm:$0xf]
    %v961 = vld [vmem:[#allocation8 + $0xbc] sm:$0xf]
    %v963 = vlaneseq
    %v964 = vshrl.u32 %v963, 7
    %v965 = vsub.s32 0, %v964
    %v966 = vrot.slane %v70, %v965
    %v1016 = vunpack.c.l.b16 %v914
    %v1017 = vunpack.c.l.b16 %v915
    %v1018 = vunpack.c.l.b16 %v916
    %v1019 = vunpack.c.l.b16 %v917
    %v1020 = vunpack.c.l.b16 %v918
    %v1021 = vunpack.c.l.b16 %v919
    %v1022 = vunpack.c.l.b16 %v920
    %v1023 = vunpack.c.l.b16 %v921
    %v1024 = vunpack.c.l.b16 %v922
    %v1025 = vunpack.c.l.b16 %v923
    %v1026 = vunpack.c.l.b16 %v924
    %v1027 = vunpack.c.l.b16 %v925
    %v1028 = vunpack.c.l.b16 %v926
    %v1029 = vunpack.c.l.b16 %v927
    %v1030 = vunpack.c.l.b16 %v928
    %v1031 = vunpack.c.l.b16 %v929
    %v1032 = vunpack.c.l.b16 %v930
    %v1033 = vunpack.c.l.b16 %v931
    %v1034 = vunpack.c.l.b16 %v932
    %v1035 = vunpack.c.l.b16 %v933
    %v1036 = vunpack.c.l.b16 %v934
    %v1037 = vunpack.c.l.b16 %v935
    %v1038 = vunpack.c.l.b16 %v936
    %v1039 = vunpack.c.l.b16 %v937
    %v1040 = vunpack.c.l.b16 %v938
    %v1041 = vunpack.c.l.b16 %v939
    %v1042 = vunpack.c.l.b16 %v940
    %v1043 = vunpack.c.l.b16 %v941
    %v1044 = vunpack.c.l.b16 %v942
    %v1045 = vunpack.c.l.b16 %v943
    %v1046 = vunpack.c.l.b16 %v944
    %v1047 = vunpack.c.l.b16 %v945
    %v1048 = vunpack.c.l.b16 %v946
    %v1049 = vunpack.c.l.b16 %v947
    %v1050 = vunpack.c.l.b16 %v948
    %v1051 = vunpack.c.l.b16 %v949
    %v1052 = vunpack.c.l.b16 %v950
    %v1053 = vunpack.c.l.b16 %v951
    %v1054 = vunpack.c.l.b16 %v952
    %v1055 = vunpack.c.l.b16 %v953
    %v1056 = vunpack.c.l.b16 %v954
    %v1057 = vunpack.c.l.b16 %v955
    %v1058 = vunpack.c.l.b16 %v956
    %v1059 = vunpack.c.l.b16 %v957
    %v1060 = vunpack.c.l.b16 %v958
    %v1061 = vunpack.c.l.b16 %v959
    %v1062 = vunpack.c.l.b16 %v960
    %v1063 = vunpack.c.l.b16 %v961
    %v1064 = vpack.c.b16 %v1017, %v1016
    %v1065 = vpack.c.b16 %v1019, %v1018
    %v1066 = vpack.c.b16 %v1021, %v1020
    %v1067 = vpack.c.b16 %v1023, %v1022
    %v1068 = vpack.c.b16 %v1025, %v1024
    %v1069 = vpack.c.b16 %v1027, %v1026
    %v1070 = vpack.c.b16 %v1029, %v1028
    %v1071 = vpack.c.b16 %v1031, %v1030
    %v1072 = vpack.c.b16 %v1033, %v1032
    %v1073 = vpack.c.b16 %v1035, %v1034
    %v1074 = vpack.c.b16 %v1037, %v1036
    %v1075 = vpack.c.b16 %v1039, %v1038
    %v1076 = vpack.c.b16 %v1041, %v1040
    %v1077 = vpack.c.b16 %v1043, %v1042
    %v1078 = vpack.c.b16 %v1045, %v1044
    %v1079 = vpack.c.b16 %v1047, %v1046
    %v1080 = vpack.c.b16 %v1049, %v1048
    %v1081 = vpack.c.b16 %v1051, %v1050
    %v1082 = vpack.c.b16 %v1053, %v1052
    %v1083 = vpack.c.b16 %v1055, %v1054
    %v1084 = vpack.c.b16 %v1057, %v1056
    %v1085 = vpack.c.b16 %v1059, %v1058
    %v1086 = vpack.c.b16 %v1061, %v1060
    %v1087 = vpack.c.b16 %v1063, %v1062
    %1112 = vmatprep.subr.bf16.mxu0 0
    %1113 = vmatpush1.bf16.msra.mxu0 %v1064
    %1114 = vmatprep.subr.bf16.mxu0 0
    %1115 = vmatpush1.bf16.msra.mxu0 %v1065
    %1116 = vmatprep.subr.bf16.mxu0 0
    %1117 = vmatpush1.bf16.msra.mxu0 %v1066
    %1118 = vmatprep.subr.bf16.mxu0 0
    %1119 = vmatpush1.bf16.msra.mxu0 %v1067
    %1120 = vmatprep.subr.bf16.mxu0 0
    %1121 = vmatpush1.bf16.msra.mxu0 %v1068
    %1122 = vmatprep.subr.bf16.mxu0 0
    %1123 = vmatpush1.bf16.msra.mxu0 %v1069
    %1124 = vmatprep.subr.bf16.mxu0 0
    %1125 = vmatpush1.bf16.msra.mxu0 %v1070
    %1126 = vmatprep.subr.bf16.mxu0 0
    %1127 = vmatpush1.bf16.msra.mxu0 %v1071
    %1128 = vmatprep.subr.bf16.mxu0 0
    %1129 = vmatpush1.bf16.msra.mxu0 %v1072
    %1130 = vmatprep.subr.bf16.mxu0 0
    %1131 = vmatpush1.bf16.msra.mxu0 %v1073
    %1132 = vmatprep.subr.bf16.mxu0 0
    %1133 = vmatpush1.bf16.msra.mxu0 %v1074
    %1134 = vmatprep.subr.bf16.mxu0 0
    %1135 = vmatpush1.bf16.msra.mxu0 %v1075
    %1136 = vmatprep.subr.bf16.mxu0 0
    %1137 = vmatpush1.bf16.msra.mxu0 %v1076
    %1138 = vmatprep.subr.bf16.mxu0 0
    %1139 = vmatpush1.bf16.msra.mxu0 %v1077
    %1140 = vmatprep.subr.bf16.mxu0 0
    %1141 = vmatpush1.bf16.msra.mxu0 %v1078
    %1142 = vmatprep.subr.bf16.mxu0 0
    %1143 = vmatpush1.bf16.msra.mxu0 %v1079
    %1144 = vmatprep.mubr.bf16.mxu0 %v912
    %1145 = vmatmul.mubr.bf16.gmra.mrb[0].mxu0 %v911
    %v1146 = vpop.f32.mrb[0].mxu0
    %v1147 = vadd.f32 %v966, %v1146
    %v1148 = vpop.f32.mrb[0].mxu0
    %v1149 = vpop.f32.mrb[0].mxu0
    %v1150 = vpop.f32.mrb[0].mxu0
    %1151 = vdwg.mxu0
    %1152 = vmatprep.subr.bf16.mxu0 0
    %1153 = vmatpush1.bf16.msra.mxu0 %v1080
    %1154 = vmatprep.subr.bf16.mxu0 0
    %1155 = vmatpush1.bf16.msra.mxu0 %v1081
    %1156 = vmatprep.subr.bf16.mxu0 0
    %1157 = vmatpush1.bf16.msra.mxu0 %v1082
    %1158 = vmatprep.subr.bf16.mxu0 0
    %1159 = vmatpush1.bf16.msra.mxu0 %v1083
    %1160 = vmatprep.subr.bf16.mxu0 0
    %1161 = vmatpush1.bf16.msra.mxu0 %v1084
    %1162 = vmatprep.subr.bf16.mxu0 0
    %1163 = vmatpush1.bf16.msra.mxu0 %v1085
    %1164 = vmatprep.subr.bf16.mxu0 0
    %1165 = vmatpush1.bf16.msra.mxu0 %v1086
    %1166 = vmatprep.subr.bf16.mxu0 0
    %1167 = vmatpush1.bf16.msra.mxu0 %v1087
    %1168 = vmatprep.subr.bf16.mxu0 0
    %1169 = vmatpush1.bf16.msra.mxu0 0
    %1170 = vmatprep.subr.bf16.mxu0 0
    %1171 = vmatpush1.bf16.msra.mxu0 0
    %1172 = vmatprep.subr.bf16.mxu0 0
    %1173 = vmatpush1.bf16.msra.mxu0 0
    %1174 = vmatprep.subr.bf16.mxu0 0
    %1175 = vmatpush1.bf16.msra.mxu0 0
    %1176 = vmatprep.subr.bf16.mxu0 0
    %1177 = vmatpush1.bf16.msra.mxu0 0
    %1178 = vmatprep.subr.bf16.mxu0 0
    %1179 = vmatpush1.bf16.msra.mxu0 0
    %1180 = vmatprep.subr.bf16.mxu0 0
    %1181 = vmatpush1.bf16.msra.mxu0 0
    %1182 = vmatprep.subr.bf16.mxu0 0
    %1183 = vmatpush1.bf16.msra.mxu0 0
    %1184 = vmatprep.mubr.bf16.mxu0 0
    %1185 = vmatmul.mubr.bf16.gmra.mrb[0].mxu0 %v913
    %v1186 = vpop.f32.mrb[0].mxu0
    %v1187 = vadd.f32 %v1147, %v1186
    %v1188 = vpop.f32.mrb[0].mxu0
    %v1189 = vpop.f32.mrb[0].mxu0
    %v1190 = vpop.f32.mrb[0].mxu0
    %1191 = vdwg.mxu0
    %v1192 = vtanh.pop %v1187
    %v1193 = vstv %s67
    %v1194 = vmul.f32 %v1192, %v1193
    %1195 = vst [vmem:[#allocation9] sm:$0xff] %v1194
    // Predicated region
    $region38: #{tpu_custom_call.1} parent=1 // pred_check
      _
    $region39: #{tpu_custom_call.1} parent=1 // pred_check_branch
      %1197 = sbr.rel (0) target = $region41
    $region40: #{tpu_custom_call.1} parent=1 // pred_region
      %s1199 = ssub.s32 128, 32
      %1200 = vsyncadd [#allocation5], %s1199
      %s1201 = sshll.u32 [#allocation9], 4
      %s1202 = int_to_ptr.vmem [resolvable:$true] %s1201
      %1207 = dma.vmem_to_hbm [thread:$0]  %s1202, 32, %s6, [#allocation5], 32, 32, 2
    $region41: #{tpu_custom_call.1} parent=1 // pred_fallthru
      _
    // Predicated region
    $region42: #{tpu_custom_call.1} parent=1 // pred_check
      _
    $region43: #{tpu_custom_call.1} parent=1 // pred_check_branch
      %1209 = sbr.rel (0) target = $region45
    $region44: #{tpu_custom_call.1} parent=1 // pred_region
      %1210 = dma.done [#allocation5], 128
    $region45: #{tpu_custom_call.1} parent=1 // pred_fallthru
      _
    %1211 = vsyncpa [#allocation4], 1
    %1212 = vsyncpa [#allocation7], 1
    %1213 = vsyncpa [#allocation5], 1

</llo_original>
